<compile_context>
chip_gen: v5e
topology: v5e:2x2
jax: 0.10.0
libtpu: 0.0.40
codegen_flags: <defaults>
</compile_context>

<pallas_src>
import jax
import jax.numpy as jnp
from jax.experimental import pallas as pl
from jax.experimental.pallas import tpu as pltpu

IMG_SIZE = 28
IN_DIM = IMG_SIZE * IMG_SIZE        # 784
K_PAD = 896                         # 7 * 128
FEAT = 64
HALF = FEAT // 2                    # 32
OUT = 10
OUT_PAD = 128                       # lane-dense output width
BN_EPS = 1e-5


def model_kernel(x_ref, watt_ref, wfused_ref, wfc_ref, pk_ref, out_ref):
    B = x_ref.shape[0]

    pk = pk_ref[...]                               # (8, 128) f32, packed vectors
    b_att = pk[0:1, 0:FEAT]                        # (1, 64)
    b_res = pk[1:2, 0:FEAT]                        # (1, 64)  (feature-permuted)
    bn_scale = pk[2:3, 0:FEAT]                     # (1, 64)  (feature-permuted)
    bn_shift = pk[3:4, 0:FEAT]                     # (1, 64)  (feature-permuted)
    b_fc = pk[4:5, :]                              # (1, 128) (lanes 10..127 = 0)

    # ---- conv1: Att(784, 64) ------------------------------------------------
    # TODO(synk): `Att` is not defined in the reference source; approximated as
    # a dense projection 784 -> 64 (the only shape-consistent choice).
    x2 = jnp.dot(x_ref[...], watt_ref[...],        # bf16 x bf16 -> f32 acc
                 preferred_element_type=jnp.float32) + b_att           # (B, 64)
    # train=False: dropout is identity.
    x3 = jnp.maximum(x2, 0.0)

    # ---- conv2: ResGatedGraphConv (B self-loop edges per node) --------------
    # Single fused matmul: columns [0:64]=W_kq, [64:128]=W_value, [128:192]=W_skip
    fused = jnp.dot(x3.astype(jnp.bfloat16), wfused_ref[...],
                    preferred_element_type=jnp.float32)                # (B, 192)
    gate = jax.nn.sigmoid(fused[:, 0:FEAT])
    val = fused[:, FEAT:2 * FEAT]
    skip = fused[:, 2 * FEAT:3 * FEAT]
    x4 = jnp.maximum(skip + jnp.float32(B) * gate * val + b_res, 0.0)  # (B, 64)

    # ---- BatchNorm1d (eval affine, pre-folded) + MaxPool1d(2) ----------------
    # Features were permuted at prepare time so adjacent-pair pooling becomes a
    # lane-dense max of the two halves.
    xbn = x4 * bn_scale + bn_shift
    pooled = jnp.maximum(xbn[:, 0:HALF], xbn[:, HALF:FEAT])            # (B, 32)

    # ---- batch self-attention ------------------------------------------------
    att = jax.nn.sigmoid(jax.lax.dot_general(
        pooled, pooled, dimension_numbers=(((1,), (1,)), ((), ())),
        preferred_element_type=jnp.float32))                           # (B, B)
    inv_row = pl.reciprocal(jnp.sum(att, axis=1, keepdims=True), approx=True)
    att = att * inv_row
    x6 = jnp.dot(att, pooled, preferred_element_type=jnp.float32) + pooled

    # ---- fc1: Linear(32, 10), lane-dense padded to 128 output lanes ----------
    out_ref[...] = jnp.dot(x6, wfc_ref[...],
                           preferred_element_type=jnp.float32) + b_fc


def init_params(key):
    """Raw (PyTorch-layout-like) parameters."""
    ks = jax.random.split(key, 8)
    s_att = 1.0 / jnp.sqrt(jnp.float32(IN_DIM))
    s_f = 1.0 / jnp.sqrt(jnp.float32(FEAT))
    s_fc = 1.0 / jnp.sqrt(jnp.float32(HALF))

    w_att = jax.random.normal(ks[0], (IN_DIM, FEAT), jnp.float32) * s_att
    b_att = jax.random.normal(ks[1], (FEAT,), jnp.float32) * 0.01

    w_key = jax.random.normal(ks[2], (FEAT, FEAT), jnp.float32) * s_f
    w_query = jax.random.normal(ks[3], (FEAT, FEAT), jnp.float32) * s_f
    w_value = jax.random.normal(ks[4], (FEAT, FEAT), jnp.float32) * s_f
    w_skip = jax.random.normal(ks[5], (FEAT, FEAT), jnp.float32) * s_f
    b_res = jnp.zeros((FEAT,), jnp.float32)

    gamma = jnp.ones((FEAT,), jnp.float32)
    beta = jnp.zeros((FEAT,), jnp.float32)
    r_mean = jnp.zeros((FEAT,), jnp.float32)
    r_var = jnp.ones((FEAT,), jnp.float32)

    w_fc = jax.random.normal(ks[6], (HALF, OUT), jnp.float32) * s_fc
    b_fc = jax.random.normal(ks[7], (OUT,), jnp.float32) * 0.01

    return (w_att, b_att, w_key, w_query, w_value, w_skip, b_res,
            gamma, beta, r_mean, r_var, w_fc, b_fc)


def prepare_params(params):
    """Fold, fuse, permute and pack parameters for the kernel (wrapper-side)."""
    (w_att, b_att, w_key, w_query, w_value, w_skip, b_res,
     gamma, beta, r_mean, r_var, w_fc, b_fc) = params

    # Permutation putting even features first, odd features second, so that
    # MaxPool1d(2) == max(first half, second half) on the permuted axis.
    perm = jnp.concatenate([jnp.arange(0, FEAT, 2), jnp.arange(1, FEAT, 2)])

    # conv1 weight: zero-pad contraction 784 -> 896, cast to bf16 (MXU operand).
    w_att_p = jnp.zeros((K_PAD, FEAT), jnp.float32).at[:IN_DIM, :].set(w_att)
    w_att_p = w_att_p.astype(jnp.bfloat16)

    # conv2: fold Wk+Wq, fuse [W_kq | W_value | W_skip], permute output columns.
    w_kq = (w_key + w_query)[:, perm]
    w_v = w_value[:, perm]
    w_s = w_skip[:, perm]
    w_fused = jnp.concatenate([w_kq, w_v, w_s], axis=1).astype(jnp.bfloat16)

    # BatchNorm eval affine, permuted.
    bn_scale = gamma * jax.lax.rsqrt(r_var + BN_EPS)
    bn_shift = beta - r_mean * bn_scale

    # fc1 weight: lane-dense, padded 10 -> 128 output columns (f32, exact).
    w_fc_p = jnp.zeros((HALF, OUT_PAD), jnp.float32).at[:, :OUT].set(w_fc)

    # Pack all small per-feature vectors into a single (8, 128) f32 tile.
    packed = jnp.zeros((8, 128), jnp.float32)
    packed = packed.at[0, :FEAT].set(b_att)
    packed = packed.at[1, :FEAT].set(b_res[perm])
    packed = packed.at[2, :FEAT].set(bn_scale[perm])
    packed = packed.at[3, :FEAT].set(bn_shift[perm])
    packed = packed.at[4, :OUT].set(b_fc)

    return (w_att_p, w_fused, w_fc_p, packed)


def model_forward(x, prepared, train=False):
    # TODO(synk): dropout(0.15) for train=True is omitted (inference path only).
    del train
    B = x.shape[0]
    x1 = x.reshape(B, IN_DIM).astype(jnp.float32)
    x1 = jnp.pad(x1, ((0, 0), (0, K_PAD - IN_DIM))).astype(jnp.bfloat16)

    w_att_p, w_fused, w_fc_p, packed = prepared
    out_padded = pl.pallas_call(
        model_kernel,
        out_shape=jax.ShapeDtypeStruct((B, OUT_PAD), jnp.float32),
        in_specs=[pl.BlockSpec(memory_space=pltpu.MemorySpace.VMEM)] * 5,
        out_specs=pl.BlockSpec(memory_space=pltpu.MemorySpace.VMEM),
    )(x1, w_att_p, w_fused, w_fc_p, packed)
    return out_padded[:, :OUT]


if __name__ == "__main__":
    key = jax.random.PRNGKey(0)
    k_x, k_p = jax.random.split(key)

    batch = 8
    x = jax.random.normal(k_x, (batch, 1, IMG_SIZE, IMG_SIZE), jnp.float32)
    params = init_params(k_p)
    prepared = prepare_params(params)

    fwd = jax.jit(lambda xx, pp: model_forward(xx, pp, train=False))
    out = fwd(x, prepared)
    out = jax.block_until_ready(out)
    assert out.shape == (batch, OUT), out.shape
    assert bool(jnp.all(jnp.isfinite(out)))
    print("KERNEL_OK")
</pallas_src>

<mosaic_0001>
module attributes {stable_mosaic.version = 11 : i64} {
  func.func @model_kernel(%arg0: memref<8x896xbf16, #tpu.memory_space<vmem>>, %arg1: memref<896x64xbf16, #tpu.memory_space<vmem>>, %arg2: memref<64x192xbf16, #tpu.memory_space<vmem>>, %arg3: memref<32x128xf32, #tpu.memory_space<vmem>>, %arg4: memref<8x128xf32, #tpu.memory_space<vmem>>, %arg5: memref<8x128xf32, #tpu.memory_space<vmem>>) attributes {dimension_semantics = [], scalar_prefetch = 0 : i64, scratch_operands = 0 : i64, tpu.core_type = #tpu.core_type<tc>} {
    %c0 = arith.constant 0 : index
    %c0_0 = arith.constant 0 : index
    %0 = vector.load %arg4[%c0, %c0_0] : memref<8x128xf32, #tpu.memory_space<vmem>>, vector<8x128xf32>
    %1 = vector.extract_strided_slice %0 {offsets = [0, 0], sizes = [1, 64], strides = [1, 1]} : vector<8x128xf32> to vector<1x64xf32>
    %2 = vector.extract_strided_slice %0 {offsets = [1, 0], sizes = [1, 64], strides = [1, 1]} : vector<8x128xf32> to vector<1x64xf32>
    %3 = vector.extract_strided_slice %0 {offsets = [2, 0], sizes = [1, 64], strides = [1, 1]} : vector<8x128xf32> to vector<1x64xf32>
    %4 = vector.extract_strided_slice %0 {offsets = [3, 0], sizes = [1, 64], strides = [1, 1]} : vector<8x128xf32> to vector<1x64xf32>
    %5 = vector.extract_strided_slice %0 {offsets = [4, 0], sizes = [1, 128], strides = [1, 1]} : vector<8x128xf32> to vector<1x128xf32>
    %c0_1 = arith.constant 0 : index
    %c0_2 = arith.constant 0 : index
    %6 = vector.load %arg0[%c0_1, %c0_2] : memref<8x896xbf16, #tpu.memory_space<vmem>>, vector<8x896xbf16>
    %c0_3 = arith.constant 0 : index
    %c0_4 = arith.constant 0 : index
    %7 = vector.load %arg1[%c0_3, %c0_4] : memref<896x64xbf16, #tpu.memory_space<vmem>>, vector<896x64xbf16>
    %cst = arith.constant dense<0.000000e+00> : vector<8x64xf32>
    %8 = tpu.matmul %6, %7, %cst {dimension_numbers = #tpu.dot_dimension_numbers<[1], [0], [0], [1], [0, 0, 1, 1], [], []>} : vector<8x896xbf16>, vector<896x64xbf16>, vector<8x64xf32> -> vector<8x64xf32>
    %9 = vector.broadcast %1 : vector<1x64xf32> to vector<8x64xf32>
    %10 = arith.addf %8, %9 : vector<8x64xf32>
    %cst_5 = arith.constant 0.000000e+00 : f32
    %11 = vector.broadcast %cst_5 : f32 to vector<8x64xf32>
    %12 = arith.maximumf %10, %11 : vector<8x64xf32>
    %13 = arith.truncf %12 : vector<8x64xf32> to vector<8x64xbf16>
    %c0_6 = arith.constant 0 : index
    %c0_7 = arith.constant 0 : index
    %14 = vector.load %arg2[%c0_6, %c0_7] : memref<64x192xbf16, #tpu.memory_space<vmem>>, vector<64x192xbf16>
    %cst_8 = arith.constant dense<0.000000e+00> : vector<8x192xf32>
    %15 = tpu.matmul %13, %14, %cst_8 {dimension_numbers = #tpu.dot_dimension_numbers<[1], [0], [0], [1], [0, 0, 1, 1], [], []>} : vector<8x64xbf16>, vector<64x192xbf16>, vector<8x192xf32> -> vector<8x192xf32>
    %16 = vector.extract_strided_slice %15 {offsets = [0, 0], sizes = [8, 64], strides = [1, 1]} : vector<8x192xf32> to vector<8x64xf32>
    %17 = arith.negf %16 : vector<8x64xf32>
    %18 = math.exp %17 : vector<8x64xf32>
    %cst_9 = arith.constant 1.000000e+00 : f32
    %19 = vector.broadcast %cst_9 : f32 to vector<8x64xf32>
    %20 = arith.addf %19, %18 : vector<8x64xf32>
    %21 = arith.divf %19, %20 : vector<8x64xf32>
    %22 = vector.extract_strided_slice %15 {offsets = [0, 64], sizes = [8, 64], strides = [1, 1]} : vector<8x192xf32> to vector<8x64xf32>
    %23 = vector.extract_strided_slice %15 {offsets = [0, 128], sizes = [8, 64], strides = [1, 1]} : vector<8x192xf32> to vector<8x64xf32>
    %cst_10 = arith.constant 8.000000e+00 : f32
    %24 = vector.broadcast %cst_10 : f32 to vector<8x64xf32>
    %25 = arith.mulf %24, %21 : vector<8x64xf32>
    %26 = arith.mulf %25, %22 : vector<8x64xf32>
    %27 = arith.addf %23, %26 : vector<8x64xf32>
    %28 = vector.broadcast %2 : vector<1x64xf32> to vector<8x64xf32>
    %29 = arith.addf %27, %28 : vector<8x64xf32>
    %cst_11 = arith.constant 0.000000e+00 : f32
    %30 = vector.broadcast %cst_11 : f32 to vector<8x64xf32>
    %31 = arith.maximumf %29, %30 : vector<8x64xf32>
    %32 = vector.broadcast %3 : vector<1x64xf32> to vector<8x64xf32>
    %33 = arith.mulf %31, %32 : vector<8x64xf32>
    %34 = vector.broadcast %4 : vector<1x64xf32> to vector<8x64xf32>
    %35 = arith.addf %33, %34 : vector<8x64xf32>
    %36 = vector.extract_strided_slice %35 {offsets = [0, 0], sizes = [8, 32], strides = [1, 1]} : vector<8x64xf32> to vector<8x32xf32>
    %37 = vector.extract_strided_slice %35 {offsets = [0, 32], sizes = [8, 32], strides = [1, 1]} : vector<8x64xf32> to vector<8x32xf32>
    %38 = arith.maximumf %36, %37 : vector<8x32xf32>
    %cst_12 = arith.constant dense<0.000000e+00> : vector<8x8xf32>
    %39 = tpu.matmul %38, %38, %cst_12 {dimension_numbers = #tpu.dot_dimension_numbers<[1], [1], [0], [0], [0, 0, 1, 0], [], []>} : vector<8x32xf32>, vector<8x32xf32>, vector<8x8xf32> -> vector<8x8xf32>
    %40 = arith.negf %39 : vector<8x8xf32>
    %41 = math.exp %40 : vector<8x8xf32>
    %cst_13 = arith.constant 1.000000e+00 : f32
    %42 = vector.broadcast %cst_13 : f32 to vector<8x8xf32>
    %43 = arith.addf %42, %41 : vector<8x8xf32>
    %44 = arith.divf %42, %43 : vector<8x8xf32>
    %cst_14 = arith.constant dense<0.000000e+00> : vector<8xf32>
    %45 = vector.multi_reduction <add>, %44, %cst_14 [1] : vector<8x8xf32> to vector<8xf32>
    %46 = vector.shape_cast %45 : vector<8xf32> to vector<8x1xf32>
    %47 = tpu.reciprocal %46 {approx = true} : vector<8x1xf32> -> vector<8x1xf32>
    %48 = vector.broadcast %47 : vector<8x1xf32> to vector<8x8xf32>
    %49 = arith.mulf %44, %48 : vector<8x8xf32>
    %cst_15 = arith.constant dense<0.000000e+00> : vector<8x32xf32>
    %50 = tpu.matmul %49, %38, %cst_15 {dimension_numbers = #tpu.dot_dimension_numbers<[1], [0], [0], [1], [0, 0, 1, 1], [], []>} : vector<8x8xf32>, vector<8x32xf32>, vector<8x32xf32> -> vector<8x32xf32>
    %51 = arith.addf %50, %38 : vector<8x32xf32>
    %c0_16 = arith.constant 0 : index
    %c0_17 = arith.constant 0 : index
    %52 = vector.load %arg3[%c0_16, %c0_17] : memref<32x128xf32, #tpu.memory_space<vmem>>, vector<32x128xf32>
    %cst_18 = arith.constant dense<0.000000e+00> : vector<8x128xf32>
    %53 = tpu.matmul %51, %52, %cst_18 {dimension_numbers = #tpu.dot_dimension_numbers<[1], [0], [0], [1], [0, 0, 1, 1], [], []>} : vector<8x32xf32>, vector<32x128xf32>, vector<8x128xf32> -> vector<8x128xf32>
    %54 = vector.broadcast %5 : vector<1x128xf32> to vector<8x128xf32>
    %55 = arith.addf %53, %54 : vector<8x128xf32>
    %c0_19 = arith.constant 0 : index
    %c0_20 = arith.constant 0 : index
    %56 = vector.load %arg5[%c0_19, %c0_20] : memref<8x128xf32, #tpu.memory_space<vmem>>, vector<8x128xf32>
    tpu.vector_store %arg5[%c0_19, %c0_20], %55 {strides = array<i32>} : memref<8x128xf32, #tpu.memory_space<vmem>>, vector<8x128xf32>,
    return
  }
}

</mosaic_0001>

<llo_original>
// kernel: _lambda_.1
$region0: #{_lambda_.1}
  #allocation0 [shape = 'u32[]', space=smem, size = 0x4, offset = 0x4, fixed_abs, tag = 'smem constant byte address 0x4 - core index']
  #allocation1 [shape = 'u32[72,128]{1,0:T(1,128)}', space=vmem, size = 0x9000, scoped, tag = 'internal scratch']
  %s0 = inlined_call_operand.vmem [shape: bf16[8,896], index: 0, kind: input, shape index: {}]
  %s1 = inlined_call_operand.vmem [shape: bf16[896,64], index: 1, kind: input, shape index: {}]
  %s2 = inlined_call_operand.vmem [shape: bf16[64,192], index: 2, kind: input, shape index: {}]
  %s3 = inlined_call_operand.vmem [shape: f32[32,128], index: 3, kind: input, shape index: {}]
  %s4 = inlined_call_operand.vmem [shape: f32[8,128], index: 4, kind: input, shape index: {}]
  %s5 = inlined_call_operand.hbm [shape: f32[8,128], index: 5, kind: output, shape index: {}]
  %s6 = sld [smem:[#allocation0]]
  $region30: #{_lambda_.1} parent=0
    _
  %s8 = ssub.s32 1, %s6
  %s9 = scalar_select 0, %s8, %s6
  $region1: #{_lambda_.1} parent=0
    #allocation2 [shape = 'u8[4096]{0}', space=vmem, size = 0x1000, scoped, tag = 'output window, operand 0, single buffered']
    #allocation3 [shape = 's32[1]{0}', space=sflag, size = 0x4, scoped, tag = 'scoped memory for _lambda_.1']
    %10 = vsyncpa [#allocation3], 0
    // Predicated region
    $region2: #{_lambda_.1} parent=1 // pred_check
      _
    $region3: #{_lambda_.1} parent=1 // pred_check_branch
      %12 = sbr.rel (0) target = $region5
    $region4: #{_lambda_.1} parent=1 // pred_region
      _
    $region5: #{_lambda_.1} parent=1 // pred_fallthru
      _
    // Predicated region
    $region6: #{_lambda_.1} parent=1 // pred_check
      _
    $region7: #{_lambda_.1} parent=1 // pred_check_branch
      %14 = sbr.rel (0) target = $region9
    $region8: #{_lambda_.1} parent=1 // pred_region
      _
    $region9: #{_lambda_.1} parent=1 // pred_fallthru
      _
    // Predicated region
    $region10: #{_lambda_.1} parent=1 // pred_check
      _
    $region11: #{_lambda_.1} parent=1 // pred_check_branch
      %16 = sbr.rel (0) target = $region13
    $region12: #{_lambda_.1} parent=1 // pred_region
      _
    $region13: #{_lambda_.1} parent=1 // pred_fallthru
      _
    // Predicated region
    $region14: #{_lambda_.1} parent=1 // pred_check
      _
    $region15: #{_lambda_.1} parent=1 // pred_check_branch
      %18 = sbr.rel (0) target = $region17
    $region16: #{_lambda_.1} parent=1 // pred_region
      _
    $region17: #{_lambda_.1} parent=1 // pred_fallthru
      _
    // Predicated region
    $region18: #{_lambda_.1} parent=1 // pred_check
      _
    $region19: #{_lambda_.1} parent=1 // pred_check_branch
      %20 = sbr.rel (0) target = $region21
    $region20: #{_lambda_.1} parent=1 // pred_region
      _
    $region21: #{_lambda_.1} parent=1 // pred_fallthru
      _
    %v22 = vld [vmem:[%s4] sm:$0xff]
    %v23 = vld [vmem:[%s0] sm:$0xff]
    %v24 = vld [vmem:[%s0 + $0x8] sm:$0xff]
    %v25 = vld [vmem:[%s0 + $0x10] sm:$0xff]
    %v26 = vld [vmem:[%s0 + $0x18] sm:$0xf]
    %v27 = vld [vmem:[%s1] sm:$0xf]
    %v28 = vld [vmem:[%s1 + $0x4] sm:$0xf]
    %v29 = vld [vmem:[%s1 + $0x8] sm:$0xf]
    %v30 = vld [vmem:[%s1 + $0xc] sm:$0xf]
    %v31 = vld [vmem:[%s1 + $0x10] sm:$0xf]
    %v32 = vld [vmem:[%s1 + $0x14] sm:$0xf]
    %v33 = vld [vmem:[%s1 + $0x18] sm:$0xf]
    %v34 = vld [vmem:[%s1 + $0x1c] sm:$0xf]
    %v35 = vld [vmem:[%s1 + $0x20] sm:$0xf]
    %v36 = vld [vmem:[%s1 + $0x24] sm:$0xf]
    %v37 = vld [vmem:[%s1 + $0x28] sm:$0xf]
    %v38 = vld [vmem:[%s1 + $0x2c] sm:$0xf]
    %v39 = vld [vmem:[%s1 + $0x30] sm:$0xf]
    %v40 = vld [vmem:[%s1 + $0x34] sm:$0xf]
    %v41 = vld [vmem:[%s1 + $0x38] sm:$0xf]
    %v42 = vld [vmem:[%s1 + $0x3c] sm:$0xf]
    %v43 = vld [vmem:[%s1 + $0x40] sm:$0xf]
    %v44 = vld [vmem:[%s1 + $0x44] sm:$0xf]
    %v45 = vld [vmem:[%s1 + $0x48] sm:$0xf]
    %v46 = vld [vmem:[%s1 + $0x4c] sm:$0xf]
    %v47 = vld [vmem:[%s1 + $0x50] sm:$0xf]
    %v48 = vld [vmem:[%s1 + $0x54] sm:$0xf]
    %v49 = vld [vmem:[%s1 + $0x58] sm:$0xf]
    %v50 = vld [vmem:[%s1 + $0x5c] sm:$0xf]
    %v51 = vld [vmem:[%s1 + $0x60] sm:$0xf]
    %v52 = vld [vmem:[%s1 + $0x64] sm:$0xf]
    %v53 = vld [vmem:[%s1 + $0x68] sm:$0xf]
    %v54 = vld [vmem:[%s1 + $0x6c] sm:$0xf]
    %v55 = vld [vmem:[%s1 + $0x70] sm:$0xf]
    %v56 = vld [vmem:[%s1 + $0x74] sm:$0xf]
    %v57 = vld [vmem:[%s1 + $0x78] sm:$0xf]
    %v58 = vld [vmem:[%s1 + $0x7c] sm:$0xf]
    %v59 = vld [vmem:[%s1 + $0x80] sm:$0xf]
    %v60 = vld [vmem:[%s1 + $0x84] sm:$0xf]
    %v61 = vld [vmem:[%s1 + $0x88] sm:$0xf]
    %v62 = vld [vmem:[%s1 + $0x8c] sm:$0xf]
    %v63 = vld [vmem:[%s1 + $0x90] sm:$0xf]
    %v64 = vld [vmem:[%s1 + $0x94] sm:$0xf]
    %v65 = vld [vmem:[%s1 + $0x98] sm:$0xf]
    %v66 = vld [vmem:[%s1 + $0x9c] sm:$0xf]
    %v67 = vld [vmem:[%s1 + $0xa0] sm:$0xf]
    %v68 = vld [vmem:[%s1 + $0xa4] sm:$0xf]
    %v69 = vld [vmem:[%s1 + $0xa8] sm:$0xf]
    %v70 = vld [vmem:[%s1 + $0xac] sm:$0xf]
    %v71 = vld [vmem:[%s1 + $0xb0] sm:$0xf]
    %v72 = vld [vmem:[%s1 + $0xb4] sm:$0xf]
    %v73 = vld [vmem:[%s1 + $0xb8] sm:$0xf]
    %v74 = vld [vmem:[%s1 + $0xbc] sm:$0xf]
    %v75 = vld [vmem:[%s1 + $0xc0] sm:$0xf]
    %v76 = vld [vmem:[%s1 + $0xc4] sm:$0xf]
    %v77 = vld [vmem:[%s1 + $0xc8] sm:$0xf]
    %v78 = vld [vmem:[%s1 + $0xcc] sm:$0xf]
    %v79 = vld [vmem:[%s1 + $0xd0] sm:$0xf]
    %v80 = vld [vmem:[%s1 + $0xd4] sm:$0xf]
    %v81 = vld [vmem:[%s1 + $0xd8] sm:$0xf]
    %v82 = vld [vmem:[%s1 + $0xdc] sm:$0xf]
    %v83 = vld [vmem:[%s1 + $0xe0] sm:$0xf]
    %v84 = vld [vmem:[%s1 + $0xe4] sm:$0xf]
    %v85 = vld [vmem:[%s1 + $0xe8] sm:$0xf]
    %v86 = vld [vmem:[%s1 + $0xec] sm:$0xf]
    %v87 = vld [vmem:[%s1 + $0xf0] sm:$0xf]
    %v88 = vld [vmem:[%s1 + $0xf4] sm:$0xf]
    %v89 = vld [vmem:[%s1 + $0xf8] sm:$0xf]
    %v90 = vld [vmem:[%s1 + $0xfc] sm:$0xf]
    %v91 = vld [vmem:[%s1 + $0x100] sm:$0xf]
    %v92 = vld [vmem:[%s1 + $0x104] sm:$0xf]
    %v93 = vld [vmem:[%s1 + $0x108] sm:$0xf]
    %v94 = vld [vmem:[%s1 + $0x10c] sm:$0xf]
    %v95 = vld [vmem:[%s1 + $0x110] sm:$0xf]
    %v96 = vld [vmem:[%s1 + $0x114] sm:$0xf]
    %v97 = vld [vmem:[%s1 + $0x118] sm:$0xf]
    %v98 = vld [vmem:[%s1 + $0x11c] sm:$0xf]
    %v99 = vld [vmem:[%s1 + $0x120] sm:$0xf]
    %v100 = vld [vmem:[%s1 + $0x124] sm:$0xf]
    %v101 = vld [vmem:[%s1 + $0x128] sm:$0xf]
    %v102 = vld [vmem:[%s1 + $0x12c] sm:$0xf]
    %v103 = vld [vmem:[%s1 + $0x130] sm:$0xf]
    %v104 = vld [vmem:[%s1 + $0x134] sm:$0xf]
    %v105 = vld [vmem:[%s1 + $0x138] sm:$0xf]
    %v106 = vld [vmem:[%s1 + $0x13c] sm:$0xf]
    %v107 = vld [vmem:[%s1 + $0x140] sm:$0xf]
    %v108 = vld [vmem:[%s1 + $0x144] sm:$0xf]
    %v109 = vld [vmem:[%s1 + $0x148] sm:$0xf]
    %v110 = vld [vmem:[%s1 + $0x14c] sm:$0xf]
    %v111 = vld [vmem:[%s1 + $0x150] sm:$0xf]
    %v112 = vld [vmem:[%s1 + $0x154] sm:$0xf]
    %v113 = vld [vmem:[%s1 + $0x158] sm:$0xf]
    %v114 = vld [vmem:[%s1 + $0x15c] sm:$0xf]
    %v115 = vld [vmem:[%s1 + $0x160] sm:$0xf]
    %v116 = vld [vmem:[%s1 + $0x164] sm:$0xf]
    %v117 = vld [vmem:[%s1 + $0x168] sm:$0xf]
    %v118 = vld [vmem:[%s1 + $0x16c] sm:$0xf]
    %v119 = vld [vmem:[%s1 + $0x170] sm:$0xf]
    %v120 = vld [vmem:[%s1 + $0x174] sm:$0xf]
    %v121 = vld [vmem:[%s1 + $0x178] sm:$0xf]
    %v122 = vld [vmem:[%s1 + $0x17c] sm:$0xf]
    %v123 = vld [vmem:[%s1 + $0x180] sm:$0xf]
    %v124 = vld [vmem:[%s1 + $0x184] sm:$0xf]
    %v125 = vld [vmem:[%s1 + $0x188] sm:$0xf]
    %v126 = vld [vmem:[%s1 + $0x18c] sm:$0xf]
    %v127 = vld [vmem:[%s1 + $0x190] sm:$0xf]
    %v128 = vld [vmem:[%s1 + $0x194] sm:$0xf]
    %v129 = vld [vmem:[%s1 + $0x198] sm:$0xf]
    %v130 = vld [vmem:[%s1 + $0x19c] sm:$0xf]
    %v131 = vld [vmem:[%s1 + $0x1a0] sm:$0xf]
    %v132 = vld [vmem:[%s1 + $0x1a4] sm:$0xf]
    %v133 = vld [vmem:[%s1 + $0x1a8] sm:$0xf]
    %v134 = vld [vmem:[%s1 + $0x1ac] sm:$0xf]
    %v135 = vld [vmem:[%s1 + $0x1b0] sm:$0xf]
    %v136 = vld [vmem:[%s1 + $0x1b4] sm:$0xf]
    %v137 = vld [vmem:[%s1 + $0x1b8] sm:$0xf]
    %v138 = vld [vmem:[%s1 + $0x1bc] sm:$0xf]
    %v139 = vperm.slane %v22, 0
    %v144 = vunpack.c.l.b16 %v23
    %v145 = vunpack.c.h.b16 %v23
    %v146 = vunpack.c.l.b16 %v24
    %v147 = vunpack.c.h.b16 %v24
    %v148 = vunpack.c.l.b16 %v25
    %v149 = vunpack.c.h.b16 %v25
    %v150 = vunpack.c.l.b16 %v26
    %v151 = vpack.c.b16 %v144, %v144
    %v152 = vpack.c.b16 %v145, %v145
    %v153 = vpack.c.b16 %v146, %v146
    %v154 = vpack.c.b16 %v147, %v147
    %v155 = vpack.c.b16 %v148, %v148
    %v156 = vpack.c.b16 %v149, %v149
    %v157 = vpack.c.b16 %v150, %v150
    %v277 = vunpack.c.l.b16 %v27
    %v278 = vunpack.c.l.b16 %v28
    %v279 = vunpack.c.l.b16 %v29
    %v280 = vunpack.c.l.b16 %v30
    %v281 = vunpack.c.l.b16 %v31
    %v282 = vunpack.c.l.b16 %v32
    %v283 = vunpack.c.l.b16 %v33
    %v284 = vunpack.c.l.b16 %v34
    %v285 = vunpack.c.l.b16 %v35
    %v286 = vunpack.c.l.b16 %v36
    %v287 = vunpack.c.l.b16 %v37
    %v288 = vunpack.c.l.b16 %v38
    %v289 = vunpack.c.l.b16 %v39
    %v290 = vunpack.c.l.b16 %v40
    %v291 = vunpack.c.l.b16 %v41
    %v292 = vunpack.c.l.b16 %v42
    %v293 = vunpack.c.l.b16 %v43
    %v294 = vunpack.c.l.b16 %v44
    %v295 = vunpack.c.l.b16 %v45
    %v296 = vunpack.c.l.b16 %v46
    %v297 = vunpack.c.l.b16 %v47
    %v298 = vunpack.c.l.b16 %v48
    %v299 = vunpack.c.l.b16 %v49
    %v300 = vunpack.c.l.b16 %v50
    %v301 = vunpack.c.l.b16 %v51
    %v302 = vunpack.c.l.b16 %v52
    %v303 = vunpack.c.l.b16 %v53
    %v304 = vunpack.c.l.b16 %v54
    %v305 = vunpack.c.l.b16 %v55
    %v306 = vunpack.c.l.b16 %v56
    %v307 = vunpack.c.l.b16 %v57
    %v308 = vunpack.c.l.b16 %v58
    %v309 = vunpack.c.l.b16 %v59
    %v310 = vunpack.c.l.b16 %v60
    %v311 = vunpack.c.l.b16 %v61
    %v312 = vunpack.c.l.b16 %v62
    %v313 = vunpack.c.l.b16 %v63
    %v314 = vunpack.c.l.b16 %v64
    %v315 = vunpack.c.l.b16 %v65
    %v316 = vunpack.c.l.b16 %v66
    %v317 = vunpack.c.l.b16 %v67
    %v318 = vunpack.c.l.b16 %v68
    %v319 = vunpack.c.l.b16 %v69
    %v320 = vunpack.c.l.b16 %v70
    %v321 = vunpack.c.l.b16 %v71
    %v322 = vunpack.c.l.b16 %v72
    %v323 = vunpack.c.l.b16 %v73
    %v324 = vunpack.c.l.b16 %v74
    %v325 = vunpack.c.l.b16 %v75
    %v326 = vunpack.c.l.b16 %v76
    %v327 = vunpack.c.l.b16 %v77
    %v328 = vunpack.c.l.b16 %v78
    %v329 = vunpack.c.l.b16 %v79
    %v330 = vunpack.c.l.b16 %v80
    %v331 = vunpack.c.l.b16 %v81
    %v332 = vunpack.c.l.b16 %v82
    %v333 = vunpack.c.l.b16 %v83
    %v334 = vunpack.c.l.b16 %v84
    %v335 = vunpack.c.l.b16 %v85
    %v336 = vunpack.c.l.b16 %v86
    %v337 = vunpack.c.l.b16 %v87
    %v338 = vunpack.c.l.b16 %v88
    %v339 = vunpack.c.l.b16 %v89
    %v340 = vunpack.c.l.b16 %v90
    %v341 = vunpack.c.l.b16 %v91
    %v342 = vunpack.c.l.b16 %v92
    %v343 = vunpack.c.l.b16 %v93
    %v344 = vunpack.c.l.b16 %v94
    %v345 = vunpack.c.l.b16 %v95
    %v346 = vunpack.c.l.b16 %v96
    %v347 = vunpack.c.l.b16 %v97
    %v348 = vunpack.c.l.b16 %v98
    %v349 = vunpack.c.l.b16 %v99
    %v350 = vunpack.c.l.b16 %v100
    %v351 = vunpack.c.l.b16 %v101
    %v352 = vunpack.c.l.b16 %v102
    %v353 = vunpack.c.l.b16 %v103
    %v354 = vunpack.c.l.b16 %v104
    %v355 = vunpack.c.l.b16 %v105
    %v356 = vunpack.c.l.b16 %v106
    %v357 = vunpack.c.l.b16 %v107
    %v358 = vunpack.c.l.b16 %v108
    %v359 = vunpack.c.l.b16 %v109
    %v360 = vunpack.c.l.b16 %v110
    %v361 = vunpack.c.l.b16 %v111
    %v362 = vunpack.c.l.b16 %v112
    %v363 = vunpack.c.l.b16 %v113
    %v364 = vunpack.c.l.b16 %v114
    %v365 = vunpack.c.l.b16 %v115
    %v366 = vunpack.c.l.b16 %v116
    %v367 = vunpack.c.l.b16 %v117
    %v368 = vunpack.c.l.b16 %v118
    %v369 = vunpack.c.l.b16 %v119
    %v370 = vunpack.c.l.b16 %v120
    %v371 = vunpack.c.l.b16 %v121
    %v372 = vunpack.c.l.b16 %v122
    %v373 = vunpack.c.l.b16 %v123
    %v374 = vunpack.c.l.b16 %v124
    %v375 = vunpack.c.l.b16 %v125
    %v376 = vunpack.c.l.b16 %v126
    %v377 = vunpack.c.l.b16 %v127
    %v378 = vunpack.c.l.b16 %v128
    %v379 = vunpack.c.l.b16 %v129
    %v380 = vunpack.c.l.b16 %v130
    %v381 = vunpack.c.l.b16 %v131
    %v382 = vunpack.c.l.b16 %v132
    %v383 = vunpack.c.l.b16 %v133
    %v384 = vunpack.c.l.b16 %v134
    %v385 = vunpack.c.l.b16 %v135
    %v386 = vunpack.c.l.b16 %v136
    %v387 = vunpack.c.l.b16 %v137
    %v388 = vunpack.c.l.b16 %v138
    %v389 = vpack.c.b16 %v278, %v277
    %v390 = vpack.c.b16 %v280, %v279
    %v391 = vpack.c.b16 %v282, %v281
    %v392 = vpack.c.b16 %v284, %v283
    %v393 = vpack.c.b16 %v286, %v285
    %v394 = vpack.c.b16 %v288, %v287
    %v395 = vpack.c.b16 %v290, %v289
    %v396 = vpack.c.b16 %v292, %v291
    %v397 = vpack.c.b16 %v294, %v293
    %v398 = vpack.c.b16 %v296, %v295
    %v399 = vpack.c.b16 %v298, %v297
    %v400 = vpack.c.b16 %v300, %v299
    %v401 = vpack.c.b16 %v302, %v301
    %v402 = vpack.c.b16 %v304, %v303
    %v403 = vpack.c.b16 %v306, %v305
    %v404 = vpack.c.b16 %v308, %v307
    %v405 = vpack.c.b16 %v310, %v309
    %v406 = vpack.c.b16 %v312, %v311
    %v407 = vpack.c.b16 %v314, %v313
    %v408 = vpack.c.b16 %v316, %v315
    %v409 = vpack.c.b16 %v318, %v317
    %v410 = vpack.c.b16 %v320, %v319
    %v411 = vpack.c.b16 %v322, %v321
    %v412 = vpack.c.b16 %v324, %v323
    %v413 = vpack.c.b16 %v326, %v325
    %v414 = vpack.c.b16 %v328, %v327
    %v415 = vpack.c.b16 %v330, %v329
    %v416 = vpack.c.b16 %v332, %v331
    %v417 = vpack.c.b16 %v334, %v333
    %v418 = vpack.c.b16 %v336, %v335
    %v419 = vpack.c.b16 %v338, %v337
    %v420 = vpack.c.b16 %v340, %v339
    %v421 = vpack.c.b16 %v342, %v341
    %v422 = vpack.c.b16 %v344, %v343
    %v423 = vpack.c.b16 %v346, %v345
    %v424 = vpack.c.b16 %v348, %v347
    %v425 = vpack.c.b16 %v350, %v349
    %v426 = vpack.c.b16 %v352, %v351
    %v427 = vpack.c.b16 %v354, %v353
    %v428 = vpack.c.b16 %v356, %v355
    %v429 = vpack.c.b16 %v358, %v357
    %v430 = vpack.c.b16 %v360, %v359
    %v431 = vpack.c.b16 %v362, %v361
    %v432 = vpack.c.b16 %v364, %v363
    %v433 = vpack.c.b16 %v366, %v365
    %v434 = vpack.c.b16 %v368, %v367
    %v435 = vpack.c.b16 %v370, %v369
    %v436 = vpack.c.b16 %v372, %v371
    %v437 = vpack.c.b16 %v374, %v373
    %v438 = vpack.c.b16 %v376, %v375
    %v439 = vpack.c.b16 %v378, %v377
    %v440 = vpack.c.b16 %v380, %v379
    %v441 = vpack.c.b16 %v382, %v381
    %v442 = vpack.c.b16 %v384, %v383
    %v443 = vpack.c.b16 %v386, %v385
    %v444 = vpack.c.b16 %v388, %v387
    %501 = vmatpush.bf16.msra.mxu0 %v396
    %502 = vmatpush.bf16.msra.mxu0 %v395
    %503 = vmatpush.bf16.msra.mxu0 %v394
    %504 = vmatpush.bf16.msra.mxu0 %v393
    %505 = vmatpush.bf16.msra.mxu0 %v392
    %506 = vmatpush.bf16.msra.mxu0 %v391
    %507 = vmatpush.bf16.msra.mxu0 %v390
    %508 = vmatpush.bf16.msra.mxu0 %v389
    %509 = vmatmul.bf16.gmra.mxu0 %v151
    %v510 = vpop.f32.mrf.mxu0
    %v511 = vadd.f32 %v139, %v510
    %v512 = vpop.f32.mrf.mxu0
    %513 = vdwg.mxu0
    %514 = vmatpush.bf16.msra.mxu0 %v404
    %515 = vmatpush.bf16.msra.mxu0 %v403
    %516 = vmatpush.bf16.msra.mxu0 %v402
    %517 = vmatpush.bf16.msra.mxu0 %v401
    %518 = vmatpush.bf16.msra.mxu0 %v400
    %519 = vmatpush.bf16.msra.mxu0 %v399
    %520 = vmatpush.bf16.msra.mxu0 %v398
    %521 = vmatpush.bf16.msra.mxu0 %v397
    %522 = vmatmul.bf16.gmra.mxu0 %v152
    %v523 = vpop.f32.mrf.mxu0
    %v524 = vadd.f32 %v511, %v523
    %v525 = vpop.f32.mrf.mxu0
    %526 = vdwg.mxu0
    %527 = vmatpush.bf16.msra.mxu0 %v412
    %528 = vmatpush.bf16.msra.mxu0 %v411
    %529 = vmatpush.bf16.msra.mxu0 %v410
    %530 = vmatpush.bf16.msra.mxu0 %v409
    %531 = vmatpush.bf16.msra.mxu0 %v408
    %532 = vmatpush.bf16.msra.mxu0 %v407
    %533 = vmatpush.bf16.msra.mxu0 %v406
    %534 = vmatpush.bf16.msra.mxu0 %v405
    %535 = vmatmul.bf16.gmra.mxu0 %v153
    %v536 = vpop.f32.mrf.mxu0
    %v537 = vadd.f32 %v524, %v536
    %v538 = vpop.f32.mrf.mxu0
    %539 = vdwg.mxu0
    %540 = vmatpush.bf16.msra.mxu0 %v420
    %541 = vmatpush.bf16.msra.mxu0 %v419
    %542 = vmatpush.bf16.msra.mxu0 %v418
    %543 = vmatpush.bf16.msra.mxu0 %v417
    %544 = vmatpush.bf16.msra.mxu0 %v416
    %545 = vmatpush.bf16.msra.mxu0 %v415
    %546 = vmatpush.bf16.msra.mxu0 %v414
    %547 = vmatpush.bf16.msra.mxu0 %v413
    %548 = vmatmul.bf16.gmra.mxu0 %v154
    %v549 = vpop.f32.mrf.mxu0
    %v550 = vadd.f32 %v537, %v549
    %v551 = vpop.f32.mrf.mxu0
    %552 = vdwg.mxu0
    %553 = vmatpush.bf16.msra.mxu0 %v428
    %554 = vmatpush.bf16.msra.mxu0 %v427
    %555 = vmatpush.bf16.msra.mxu0 %v426
    %556 = vmatpush.bf16.msra.mxu0 %v425
    %557 = vmatpush.bf16.msra.mxu0 %v424
    %558 = vmatpush.bf16.msra.mxu0 %v423
    %559 = vmatpush.bf16.msra.mxu0 %v422
    %560 = vmatpush.bf16.msra.mxu0 %v421
    %561 = vmatmul.bf16.gmra.mxu0 %v155
    %v562 = vpop.f32.mrf.mxu0
    %v563 = vadd.f32 %v550, %v562
    %v564 = vpop.f32.mrf.mxu0
    %565 = vdwg.mxu0
    %566 = vmatpush.bf16.msra.mxu0 %v436
    %567 = vmatpush.bf16.msra.mxu0 %v435
    %568 = vmatpush.bf16.msra.mxu0 %v434
    %569 = vmatpush.bf16.msra.mxu0 %v433
    %570 = vmatpush.bf16.msra.mxu0 %v432
    %571 = vmatpush.bf16.msra.mxu0 %v431
    %572 = vmatpush.bf16.msra.mxu0 %v430
    %573 = vmatpush.bf16.msra.mxu0 %v429
    %574 = vmatmul.bf16.gmra.mxu0 %v156
    %v575 = vpop.f32.mrf.mxu0
    %v576 = vadd.f32 %v563, %v575
    %v577 = vpop.f32.mrf.mxu0
    %578 = vdwg.mxu0
    %579 = vmatpush.bf16.msra.mxu0 %v444
    %580 = vmatpush.bf16.msra.mxu0 %v443
    %581 = vmatpush.bf16.msra.mxu0 %v442
    %582 = vmatpush.bf16.msra.mxu0 %v441
    %583 = vmatpush.bf16.msra.mxu0 %v440
    %584 = vmatpush.bf16.msra.mxu0 %v439
    %585 = vmatpush.bf16.msra.mxu0 %v438
    %586 = vmatpush.bf16.msra.mxu0 %v437
    %587 = vmatmul.bf16.gmra.mxu0 %v157
    %v588 = vpop.f32.mrf.mxu0
    %v589 = vadd.f32 %v576, %v588
    %v590 = vpop.f32.mrf.mxu0
    %591 = vdwg.mxu0
    %v592 = vmax.f32 %v589, 0.0
    %v593 = vpack.c.bf16 %v592, %v592
    %v594 = vld [vmem:[%s2] sm:$0xff]
    %v595 = vld [vmem:[%s2 + $0x8] sm:$0xff]
    %v596 = vld [vmem:[%s2 + $0x10] sm:$0xff]
    %v597 = vld [vmem:[%s2 + $0x18] sm:$0xff]
    %v598 = vld [vmem:[%s2 + $0x20] sm:$0xff]
    %v599 = vld [vmem:[%s2 + $0x28] sm:$0xff]
    %v600 = vld [vmem:[%s2 + $0x30] sm:$0xff]
    %v601 = vld [vmem:[%s2 + $0x38] sm:$0xff]
    %v610 = vunpack.c.l.b16 %v594
    %v611 = vunpack.c.h.b16 %v594
    %v612 = vunpack.c.l.b16 %v595
    %v613 = vunpack.c.h.b16 %v595
    %v614 = vunpack.c.l.b16 %v596
    %v615 = vunpack.c.h.b16 %v596
    %v616 = vunpack.c.l.b16 %v597
    %v617 = vunpack.c.h.b16 %v597
    %v618 = vunpack.c.l.b16 %v598
    %v619 = vunpack.c.h.b16 %v598
    %v620 = vunpack.c.l.b16 %v599
    %v621 = vunpack.c.h.b16 %v599
    %v622 = vunpack.c.l.b16 %v600
    %v623 = vunpack.c.h.b16 %v600
    %v624 = vunpack.c.l.b16 %v601
    %v625 = vunpack.c.h.b16 %v601
    %v626 = vpack.c.b16 %v612, %v610
    %v627 = vpack.c.b16 %v613, %v611
    %v628 = vpack.c.b16 %v616, %v614
    %v629 = vpack.c.b16 %v617, %v615
    %v630 = vpack.c.b16 %v620, %v618
    %v631 = vpack.c.b16 %v621, %v619
    %v632 = vpack.c.b16 %v624, %v622
    %v633 = vpack.c.b16 %v625, %v623
    %vm642 = vcmask 523264
    %v644 = vsel %vm642, %v593, 0
    %646 = vmatpush.bf16.msra.mxu0 0
    %647 = vmatpush.bf16.msra.mxu0 0
    %648 = vmatpush.bf16.msra.mxu0 0
    %649 = vmatpush.bf16.msra.mxu0 0
    %650 = vmatpush.bf16.msra.mxu0 %v632
    %651 = vmatpush.bf16.msra.mxu0 %v630
    %652 = vmatpush.bf16.msra.mxu0 %v628
    %653 = vmatpush.bf16.msra.mxu0 %v626
    %654 = vmatmul.bf16.gmra.mxu0 %v644
    %v655 = vpop.f32.mrf.mxu0
    %v656 = vadd.f32 0.0, %v655
    %v657 = vpop.f32.mrf.mxu0
    %658 = vdwg.mxu0
    %659 = vmatpush.bf16.msra.mxu0 0
    %660 = vmatpush.bf16.msra.mxu0 0
    %661 = vmatpush.bf16.msra.mxu0 0
    %662 = vmatpush.bf16.msra.mxu0 0
    %663 = vmatpush.bf16.msra.mxu0 %v633
    %664 = vmatpush.bf16.msra.mxu0 %v631
    %665 = vmatpush.bf16.msra.mxu0 %v629
    %666 = vmatpush.bf16.msra.mxu0 %v627
    %667 = vmatmul.bf16.gmra.mxu0 %v644
    %v668 = vpop.f32.mrf.mxu0
    %v669 = vadd.f32 0.0, %v668
    %v670 = vpop.f32.mrf.mxu0
    %671 = vdwg.mxu0
    %v672 = vxor.u32 %v656, 2147483648
    %v673 = vmul.f32 %v672, 1.442695
    %v674 = vpow.pop %v673
    %v675 = vadd.f32 %v674, 1.0
    %v676 = vrcp.pop %v675
    %v677 = vmul.f32 %v675, %v676
    %v678 = vsub.f32 1.0, %v677
    %v679 = vmul.f32 %v676, %v678
    %v680 = vadd.f32 %v676, %v679
    %vm681 = vweird.f32 %v675
    %vm682 = vweird.f32 %v676
    %vm683 = vmor %vm681, %vm682
    %v684 = vsel %vm683, %v676, %v680
    %v685 = vand.u32 2147483647, %v675
    %vm686 = vcmp.eq.f32.partialorder %v685, 8.507059e+37
    %v687 = vand.u32 %v675, 2147483648
    %v688 = vor.u32 1.1754944e-38, %v687
    %v689 = vsel %vm686, %v688, %v684
    %v690 = vmul.f32 1.0, %v689
    %v691 = vmul.f32 %v690, 8.0
    %693 = vrot.lane.b32.xlu0 %v656, 64
    %v694 = vpop.permute.xlu0 %693
    %v696 = vmul.f32 %v691, %v694
    %v697 = vadd.f32 %v669, %v696
    %v698 = vperm.slane %v22, 1
    %v699 = vadd.f32 %v697, %v698
    %v700 = vmax.f32 %v699, 0.0
    %v701 = vperm.slane %v22, 2
    %v702 = vmul.f32 %v700, %v701
    %v703 = vperm.slane %v22, 3
    %v704 = vadd.f32 %v702, %v703
    %706 = vrot.lane.b32.xlu0 %v704, 96
    %v707 = vpop.permute.xlu0 %706
    %v709 = vmax.f32 %v704, %v707
    %vm710 = vcmask 261120
    %v712 = vsel %vm710, %v709, 0
    %714 = vmatpush.xpose.msra.mxu0 0.0
    %715 = vmatpush.xpose.msra.mxu0 0.0
    %716 = vmatpush.xpose.msra.mxu0 0.0
    %717 = vmatpush.xpose.msra.mxu0 0.0
    %718 = vmatpush.xpose.msra.mxu0 0.0
    %719 = vmatpush.xpose.msra.mxu0 0.0
    %720 = vmatpush.xpose.msra.mxu0 0.0
    %721 = vmatpush.xpose.msra.mxu0 0.0
    %722 = vmatpush.xpose.msra.mxu0 0.0
    %723 = vmatpush.xpose.msra.mxu0 0.0
    %724 = vmatpush.xpose.msra.mxu0 0.0
    %725 = vmatpush.xpose.msra.mxu0 0.0
    %726 = vmatpush.xpose.msra.mxu0 0.0
    %727 = vmatpush.xpose.msra.mxu0 0.0
    %728 = vmatpush.xpose.msra.mxu0 0.0
    %729 = vmatpush.xpose.msra.mxu0 %v712
    %730 = vmatmul.f32.gmra.mxu0 %v712
    %v731 = vpop.f32.mrf.mxu0
    %v732 = vadd.f32 0.0, %v731
    %733 = vdwg.mxu0
    %v734 = vxor.u32 %v732, 2147483648
    %v735 = vmul.f32 %v734, 1.442695
    %v736 = vpow.pop %v735
    %v737 = vadd.f32 %v736, 1.0
    %v738 = vrcp.pop %v737
    %v739 = vmul.f32 %v737, %v738
    %v740 = vsub.f32 1.0, %v739
    %v741 = vmul.f32 %v738, %v740
    %v742 = vadd.f32 %v738, %v741
    %vm743 = vweird.f32 %v737
    %vm744 = vweird.f32 %v738
    %vm745 = vmor %vm743, %vm744
    %v746 = vsel %vm745, %v738, %v742
    %v747 = vand.u32 2147483647, %v737
    %vm748 = vcmp.eq.f32.partialorder %v747, 8.507059e+37
    %v749 = vand.u32 %v737, 2147483648
    %v750 = vor.u32 1.1754944e-38, %v749
    %v751 = vsel %vm748, %v750, %v746
    %v752 = vmul.f32 1.0, %v751
    %vm753 = vcmask 64512
    %v754 = vsel %vm753, %v752, 0.0
    %755 = vadd.xlane.f32.xlu0 %v754
    %v756 = vpop.xlane.xlu0 %755
    %v757 = vrcp.pop %v756
    %v758 = vmul.f32 %v752, %v757
    %v760 = vsel %vm753, %v758, 0
    %762 = vmatpush.msra.mxu0 0.0
    %763 = vmatpush.msra.mxu0 0.0
    %764 = vmatpush.msra.mxu0 0.0
    %765 = vmatpush.msra.mxu0 0.0
    %766 = vmatpush.msra.mxu0 0.0
    %767 = vmatpush.msra.mxu0 0.0
    %768 = vmatpush.msra.mxu0 0.0
    %769 = vmatpush.msra.mxu0 0.0
    %770 = vmatpush.msra.mxu0 0.0
    %771 = vmatpush.msra.mxu0 0.0
    %772 = vmatpush.msra.mxu0 0.0
    %773 = vmatpush.msra.mxu0 0.0
    %774 = vmatpush.msra.mxu0 0.0
    %775 = vmatpush.msra.mxu0 0.0
    %776 = vmatpush.msra.mxu0 0.0
    %777 = vmatpush.msra.mxu0 %v709
    %778 = vmatmul.f32.gmra.mxu0 %v760
    %v779 = vpop.f32.mrf.mxu0
    %v780 = vadd.f32 %v709, %v779
    %781 = vdwg.mxu0
    %v782 = vld [vmem:[%s3] sm:$0xff]
    %v783 = vld [vmem:[%s3 + $0x8] sm:$0xff]
    %v784 = vld [vmem:[%s3 + $0x10] sm:$0xff]
    %v785 = vld [vmem:[%s3 + $0x18] sm:$0xff]
    %v786 = vperm.slane %v22, 4
    %v788 = vsel %vm710, %v780, 0
    %790 = vmatpush.msra.mxu0 0.0
    %791 = vmatpush.msra.mxu0 0.0
    %792 = vmatpush.msra.mxu0 0.0
    %793 = vmatpush.msra.mxu0 0.0
    %794 = vmatpush.msra.mxu0 0.0
    %795 = vmatpush.msra.mxu0 0.0
    %796 = vmatpush.msra.mxu0 0.0
    %797 = vmatpush.msra.mxu0 0.0
    %798 = vmatpush.msra.mxu0 0.0
    %799 = vmatpush.msra.mxu0 0.0
    %800 = vmatpush.msra.mxu0 0.0
    %801 = vmatpush.msra.mxu0 0.0
    %802 = vmatpush.msra.mxu0 %v785
    %803 = vmatpush.msra.mxu0 %v784
    %804 = vmatpush.msra.mxu0 %v783
    %805 = vmatpush.msra.mxu0 %v782
    %806 = vmatmul.f32.gmra.mxu0 %v788
    %v807 = vpop.f32.mrf.mxu0
    %v808 = vadd.f32 %v786, %v807
    %809 = vdwg.mxu0
    %810 = vst [vmem:[#allocation2] sm:$0xff] %v808
    // Predicated region
    $region22: #{_lambda_.1} parent=1 // pred_check
      _
    $region23: #{_lambda_.1} parent=1 // pred_check_branch
      %812 = sbr.rel (0) target = $region25
    $region24: #{_lambda_.1} parent=1 // pred_region
      %814 = vsyncadd [#allocation3], 0
      %s816 = sshll.u32 [#allocation2], 4
      %s817 = int_to_ptr.vmem [resolvable:$true] %s816
      %s818 = sshll.u32 %s5, 4
      %s819 = int_to_ptr.hbm [resolvable:$true] %s818
      %821 = dma.vmem_to_hbm [thread:$0]  %s817, 128, %s819, [#allocation3]
    $region25: #{_lambda_.1} parent=1 // pred_fallthru
      _
    // Predicated region
    $region26: #{_lambda_.1} parent=1 // pred_check
      _
    $region27: #{_lambda_.1} parent=1 // pred_check_branch
      %823 = sbr.rel (0) target = $region29
    $region28: #{_lambda_.1} parent=1 // pred_region
      %825 = dma.done [#allocation3], 128
    $region29: #{_lambda_.1} parent=1 // pred_fallthru
      _
    %826 = vsyncpa [#allocation3], 1

</llo_original>
